<compile_context>
chip_gen: v5e
topology: v5e:2x2
jax: 0.10.0
libtpu: 0.0.40
codegen_flags: <defaults>
</compile_context>

<pallas_src>
import jax
import jax.numpy as jnp
from jax import lax
from jax.experimental import pallas as pl
from jax.experimental.pallas import tpu as pltpu


def _round_up(x, m):
    return ((x + m - 1) // m) * m


def _embedding_kernel(ids_ref, val_ref, tbl_ref, o_ref):
    """One grid step: gather + scale `tok_blk` tokens via a one-hot MXU matmul.

    ids_ref : VMEM (tok_blk, 1) int32
    val_ref : VMEM (tok_blk, 1) float32
    tbl_ref : VMEM (nfeat_pad, nemb) float32  (whole table, single resident copy)
    o_ref   : VMEM (tok_blk, nemb) float32
    """
    tok_blk = ids_ref.shape[0]
    nfeat_pad = tbl_ref.shape[0]

    ids = ids_ref[...]                                              # (tok_blk, 1)
    vocab = lax.broadcasted_iota(jnp.int32, (tok_blk, nfeat_pad), 1)
    onehot = (vocab == ids).astype(tbl_ref.dtype)                   # binary one-hot

    # Row gather on the MXU.  Binary one-hot + f32 accumulation + HIGHEST precision
    # keeps this equal to a plain jnp.take row gather.
    emb = jnp.dot(onehot, tbl_ref[...],
                  preferred_element_type=jnp.float32,
                  precision=lax.Precision.HIGHEST)                  # (tok_blk, nemb)

    # Per-token scale on the VPU: (tok_blk, 1) broadcast across the lanes.
    o_ref[...] = (emb * val_ref[...]).astype(o_ref.dtype)


def prepare_embedding_table(table):
    """One-time layout prep (hoisted out of the per-forward path):
    pad the vocabulary dim to a multiple of 8 sublanes with zero rows."""
    nfeat, nemb = table.shape
    nfeat_pad = _round_up(nfeat, 8)
    return jnp.zeros((nfeat_pad, nemb), table.dtype).at[:nfeat, :].set(table)


def embedding_forward(ids, values, table_padded, *, tok_blk=512):
    """ids: (B, F) int, values: (B, F) f32, table_padded: (nfeat_pad, nemb) -> (B, F, nemb)."""
    B, F = ids.shape
    nfeat_pad, nemb = table_padded.shape
    n_tok = B * F

    # Big token tiles (512 by default, per perf guidance), clamped to the problem.
    tok_blk = max(8, min(_round_up(tok_blk, 8), _round_up(n_tok, 8)))
    n_tok_pad = _round_up(n_tok, tok_blk)

    ids_flat = jnp.zeros((n_tok_pad, 1), jnp.int32).at[:n_tok, 0].set(
        ids.reshape(-1).astype(jnp.int32))
    val_flat = jnp.zeros((n_tok_pad, 1), jnp.float32).at[:n_tok, 0].set(
        values.reshape(-1).astype(jnp.float32))

    # VMEM budget: single resident table copy + double-buffered ids/value/out tiles.
    itemsize = jnp.dtype(table_padded.dtype).itemsize
    vmem_need = (nfeat_pad * nemb * itemsize          # resident table (single copy)
                 + 2 * tok_blk * (nemb + 2) * 4)      # double-buffered per-step tiles
    vmem_limit = int(min(128 * 2**20, max(32 * 2**20, 2 * vmem_need)))

    out = pl.pallas_call(
        _embedding_kernel,
        out_shape=jax.ShapeDtypeStruct((n_tok_pad, nemb), jnp.float32),
        grid=(n_tok_pad // tok_blk,),
        in_specs=[
            pl.BlockSpec((tok_blk, 1), lambda i: (i, 0)),      # ids, per-step tile
            pl.BlockSpec((tok_blk, 1), lambda i: (i, 0)),      # values, per-step tile
            # Whole table resident in VMEM: copied in once, not double-buffered.
            pl.BlockSpec(memory_space=pltpu.MemorySpace.VMEM),
        ],
        out_specs=pl.BlockSpec((tok_blk, nemb), lambda i: (i, 0)),
        compiler_params=pltpu.CompilerParams(
            dimension_semantics=("parallel",),
            vmem_limit_bytes=vmem_limit),
    )(ids_flat, val_flat, table_padded)

    return out[:n_tok].reshape(B, F, nemb)


def embedding_forward_ref(ids, values, table):
    """Pure-JAX reference for correctness check."""
    return jnp.take(table, ids, axis=0) * values[:, :, None]


if __name__ == "__main__":
    key = jax.random.PRNGKey(0)
    B, F = 2, 4             # batch, number of feature fields
    nfeat, nemb = 100, 16   # vocabulary size, embedding dim

    key, k_tbl, k_ids, k_val = jax.random.split(key, 4)
    # xavier_uniform init of the embedding table (matches nn.init.xavier_uniform_).
    bound = (6.0 / (nfeat + nemb)) ** 0.5
    table = jax.random.uniform(k_tbl, (nfeat, nemb), jnp.float32,
                               minval=-bound, maxval=bound)
    ids = jax.random.randint(k_ids, (B, F), 0, nfeat, dtype=jnp.int32)
    values = jax.random.uniform(k_val, (B, F), jnp.float32)

    table_padded = prepare_embedding_table(table)   # one-time layout prep
    out = embedding_forward(ids, values, table_padded)
    out = jax.block_until_ready(out)

    ref = embedding_forward_ref(ids, values, table)
    assert out.shape == (B, F, nemb)
    assert jnp.allclose(out, ref, atol=1e-6, rtol=1e-6)

    print("KERNEL_OK")
</pallas_src>

<mosaic_0001>
module attributes {stable_mosaic.version = 11 : i64} {
  func.func @_embedding_kernel(%arg0: i32, %arg1: memref<8x1xi32, #tpu.memory_space<vmem>>, %arg2: memref<8x1xf32, #tpu.memory_space<vmem>>, %arg3: memref<104x16xf32, #tpu.memory_space<vmem>>, %arg4: memref<8x16xf32, #tpu.memory_space<vmem>>) attributes {dimension_semantics = [#tpu.dimension_semantics<parallel>], iteration_bounds = array<i64: 1>, scalar_prefetch = 0 : i64, scratch_operands = 0 : i64, tpu.core_type = #tpu.core_type<tc>, window_params = [{transform_indices = @transform_0, window_bounds = array<i64: 8, 1>}, {transform_indices = @transform_1, window_bounds = array<i64: 8, 1>}, {pipeline_mode = #tpu.pipeline_mode<synchronous>, transform_indices = @transform_2, window_bounds = array<i64: 104, 16>}, {transform_indices = @transform_3, window_bounds = array<i64: 8, 16>}]} {
    %c0 = arith.constant 0 : index
    %c0_0 = arith.constant 0 : index
    %0 = vector.load %arg1[%c0, %c0_0] : memref<8x1xi32, #tpu.memory_space<vmem>>, vector<8x1xi32>
    %1 = tpu.iota {dimensions = array<i32: 1>} : vector<8x104xi32>
    %2 = vector.broadcast %0 : vector<8x1xi32> to vector<8x104xi32>
    %3 = arith.cmpi eq, %1, %2 : vector<8x104xi32>
    %4 = arith.extui %3 : vector<8x104xi1> to vector<8x104xi32>
    %5 = arith.sitofp %4 : vector<8x104xi32> to vector<8x104xf32>
    %c0_1 = arith.constant 0 : index
    %c0_2 = arith.constant 0 : index
    %6 = vector.load %arg3[%c0_1, %c0_2] : memref<104x16xf32, #tpu.memory_space<vmem>>, vector<104x16xf32>
    %cst = arith.constant dense<0.000000e+00> : vector<8x16xf32>
    %7 = tpu.matmul %5, %6, %cst {dimension_numbers = #tpu.dot_dimension_numbers<[1], [0], [0], [1], [0, 0, 1, 1], [], []>, precision = #tpu.contract_precision<fp32>} : vector<8x104xf32>, vector<104x16xf32>, vector<8x16xf32> -> vector<8x16xf32>
    %c0_3 = arith.constant 0 : index
    %c0_4 = arith.constant 0 : index
    %8 = vector.load %arg2[%c0_3, %c0_4] : memref<8x1xf32, #tpu.memory_space<vmem>>, vector<8x1xf32>
    %9 = vector.broadcast %8 : vector<8x1xf32> to vector<8x16xf32>
    %10 = arith.mulf %7, %9 : vector<8x16xf32>
    %c0_5 = arith.constant 0 : index
    %c0_6 = arith.constant 0 : index
    %11 = vector.load %arg4[%c0_5, %c0_6] : memref<8x16xf32, #tpu.memory_space<vmem>>, vector<8x16xf32>
    tpu.vector_store %arg4[%c0_5, %c0_6], %10 {strides = array<i32>} : memref<8x16xf32, #tpu.memory_space<vmem>>, vector<8x16xf32>,
    return
  }
  func.func @transform_0(%arg0: i32) -> (i32, i32) {
    %c0_i32 = arith.constant 0 : i32
    %c0_i32_0 = arith.constant 0 : i32
    return %arg0, %c0_i32 : i32, i32
  }
  func.func @transform_1(%arg0: i32) -> (i32, i32) {
    %c0_i32 = arith.constant 0 : i32
    %c0_i32_0 = arith.constant 0 : i32
    return %arg0, %c0_i32 : i32, i32
  }
  func.func @transform_2(%arg0: i32) -> (i32, i32) {
    %c0_i32 = arith.constant 0 : i32
    %c0_i32_0 = arith.constant 0 : i32
    %c0_i32_1 = arith.constant 0 : i32
    return %c0_i32, %c0_i32_0 : i32, i32
  }
  func.func @transform_3(%arg0: i32) -> (i32, i32) {
    %c0_i32 = arith.constant 0 : i32
    %c0_i32_0 = arith.constant 0 : i32
    return %arg0, %c0_i32 : i32, i32
  }
}

</mosaic_0001>

<llo_original>
// kernel: tpu_custom_call.1
$region0: #{tpu_custom_call.1}
  #allocation0 [shape = 'u32[]', space=smem, size = 0x4, offset = 0x4, fixed_abs, tag = 'smem constant byte address 0x4 - core index']
  #allocation1 [shape = 'u32[72,128]{1,0:T(1,128)}', space=vmem, size = 0x9000, scoped, tag = 'internal scratch']
  %s0 = inlined_call_operand.vmem [shape: s32[8,1], index: 0, kind: input, shape index: {}]
  %s1 = inlined_call_operand.vmem [shape: f32[8,1], index: 1, kind: input, shape index: {}]
  %s2 = inlined_call_operand.vmem [shape: f32[104,16], index: 2, kind: input, shape index: {}]
  %s3 = inlined_call_operand.hbm [shape: f32[8,16], index: 3, kind: output, shape index: {}]
  %s4 = sld [smem:[#allocation0]]
  $region22: #{tpu_custom_call.1} parent=0
    _
  %s6 = ssub.s32 1, %s4
  %s7 = scalar_select 0, %s6, %s4
  $region1: #{tpu_custom_call.1} parent=0
    #allocation2 [shape = 'u8[4096]{0}', space=vmem, size = 0x1000, scoped, tag = 'output window, operand 0, single buffered']
    #allocation3 [shape = 's32[1]{0}', space=sflag, size = 0x4, scoped, tag = 'scoped memory for tpu_custom_call.1']
    %8 = vsyncpa [#allocation3], 0
    // Predicated region
    $region2: #{tpu_custom_call.1} parent=1 // pred_check
      _
    $region3: #{tpu_custom_call.1} parent=1 // pred_check_branch
      %10 = sbr.rel (0) target = $region5
    $region4: #{tpu_custom_call.1} parent=1 // pred_region
      _
    $region5: #{tpu_custom_call.1} parent=1 // pred_fallthru
      _
    // Predicated region
    $region6: #{tpu_custom_call.1} parent=1 // pred_check
      _
    $region7: #{tpu_custom_call.1} parent=1 // pred_check_branch
      %12 = sbr.rel (0) target = $region9
    $region8: #{tpu_custom_call.1} parent=1 // pred_region
      _
    $region9: #{tpu_custom_call.1} parent=1 // pred_fallthru
      _
    // Predicated region
    $region10: #{tpu_custom_call.1} parent=1 // pred_check
      _
    $region11: #{tpu_custom_call.1} parent=1 // pred_check_branch
      %14 = sbr.rel (0) target = $region13
    $region12: #{tpu_custom_call.1} parent=1 // pred_region
      _
    $region13: #{tpu_custom_call.1} parent=1 // pred_fallthru
      _
    %v15 = vld [vmem:[%s0] sm:$0xff]
    %v16 = vlaneseq
    %v17 = vand.u32 %v16, 127
    %18 = vset.pattern.permute.xlu0 0
    %19 = vperm.xlu0 %18, %v15
    %v20 = vpop.permute.xlu0 %19
    %vm21 = vcmp.eq.s32.totalorder %v17, %v20
    %v22 = vsel %vm21, 1, 0
    %v23 = vcvt.s32.f32 %v22
    %v24 = vld [vmem:[%s2] sm:$0xff]
    %v25 = vld [vmem:[%s2 + $0x8] sm:$0xff]
    %v26 = vld [vmem:[%s2 + $0x10] sm:$0xff]
    %v27 = vld [vmem:[%s2 + $0x18] sm:$0xff]
    %v28 = vld [vmem:[%s2 + $0x20] sm:$0xff]
    %v29 = vld [vmem:[%s2 + $0x28] sm:$0xff]
    %v30 = vld [vmem:[%s2 + $0x30] sm:$0xff]
    %v31 = vld [vmem:[%s2 + $0x38] sm:$0xff]
    %v32 = vld [vmem:[%s2 + $0x40] sm:$0xff]
    %v33 = vld [vmem:[%s2 + $0x48] sm:$0xff]
    %v34 = vld [vmem:[%s2 + $0x50] sm:$0xff]
    %v35 = vld [vmem:[%s2 + $0x58] sm:$0xff]
    %v36 = vld [vmem:[%s2 + $0x60] sm:$0xff]
    %vm37 = vcmask 850944
    %v39 = vsel %vm37, %v23, 0
    %41 = vmatpush.msra.mxu0 0.0
    %42 = vmatpush.msra.mxu0 0.0
    %43 = vmatpush.msra.mxu0 0.0
    %v44 = vand.u32 %v36, 4294901760
    %45 = vmatpush.msra.mxu0 %v44
    %v46 = vand.u32 %v35, 4294901760
    %47 = vmatpush.msra.mxu0 %v46
    %v48 = vand.u32 %v34, 4294901760
    %49 = vmatpush.msra.mxu0 %v48
    %v50 = vand.u32 %v33, 4294901760
    %51 = vmatpush.msra.mxu0 %v50
    %v52 = vand.u32 %v32, 4294901760
    %53 = vmatpush.msra.mxu0 %v52
    %v54 = vand.u32 %v31, 4294901760
    %55 = vmatpush.msra.mxu0 %v54
    %v56 = vand.u32 %v30, 4294901760
    %57 = vmatpush.msra.mxu0 %v56
    %v58 = vand.u32 %v29, 4294901760
    %59 = vmatpush.msra.mxu0 %v58
    %v60 = vand.u32 %v28, 4294901760
    %61 = vmatpush.msra.mxu0 %v60
    %v62 = vand.u32 %v27, 4294901760
    %63 = vmatpush.msra.mxu0 %v62
    %v64 = vand.u32 %v26, 4294901760
    %65 = vmatpush.msra.mxu0 %v64
    %v66 = vand.u32 %v25, 4294901760
    %67 = vmatpush.msra.mxu0 %v66
    %v68 = vand.u32 %v24, 4294901760
    %69 = vmatpush.msra.mxu0 %v68
    %v70 = vand.u32 %v39, 4294901760
    %v71 = vsub.f32 %v39, %v70
    %v72 = vand.u32 %v71, 4294901760
    %v73 = vsub.f32 %v71, %v72
    %v74 = vand.u32 %v73, 4294901760
    %75 = vmatmul.f32.gmra.mxu0 %v74
    %v76 = vpop.f32.mrf.mxu0
    %v77 = vadd.f32 0.0, %v76
    %78 = vdwg.mxu0
    %79 = vmatpush.msra.mxu0 0.0
    %80 = vmatpush.msra.mxu0 0.0
    %81 = vmatpush.msra.mxu0 0.0
    %v82 = vand.u32 %v36, 4294901760
    %v83 = vsub.f32 %v36, %v82
    %v84 = vand.u32 %v83, 4294901760
    %v85 = vsub.f32 %v83, %v84
    %v86 = vand.u32 %v85, 4294901760
    %87 = vmatpush.msra.mxu0 %v86
    %v88 = vand.u32 %v35, 4294901760
    %v89 = vsub.f32 %v35, %v88
    %v90 = vand.u32 %v89, 4294901760
    %v91 = vsub.f32 %v89, %v90
    %v92 = vand.u32 %v91, 4294901760
    %93 = vmatpush.msra.mxu0 %v92
    %v94 = vand.u32 %v34, 4294901760
    %v95 = vsub.f32 %v34, %v94
    %v96 = vand.u32 %v95, 4294901760
    %v97 = vsub.f32 %v95, %v96
    %v98 = vand.u32 %v97, 4294901760
    %99 = vmatpush.msra.mxu0 %v98
    %v100 = vand.u32 %v33, 4294901760
    %v101 = vsub.f32 %v33, %v100
    %v102 = vand.u32 %v101, 4294901760
    %v103 = vsub.f32 %v101, %v102
    %v104 = vand.u32 %v103, 4294901760
    %105 = vmatpush.msra.mxu0 %v104
    %v106 = vand.u32 %v32, 4294901760
    %v107 = vsub.f32 %v32, %v106
    %v108 = vand.u32 %v107, 4294901760
    %v109 = vsub.f32 %v107, %v108
    %v110 = vand.u32 %v109, 4294901760
    %111 = vmatpush.msra.mxu0 %v110
    %v112 = vand.u32 %v31, 4294901760
    %v113 = vsub.f32 %v31, %v112
    %v114 = vand.u32 %v113, 4294901760
    %v115 = vsub.f32 %v113, %v114
    %v116 = vand.u32 %v115, 4294901760
    %117 = vmatpush.msra.mxu0 %v116
    %v118 = vand.u32 %v30, 4294901760
    %v119 = vsub.f32 %v30, %v118
    %v120 = vand.u32 %v119, 4294901760
    %v121 = vsub.f32 %v119, %v120
    %v122 = vand.u32 %v121, 4294901760
    %123 = vmatpush.msra.mxu0 %v122
    %v124 = vand.u32 %v29, 4294901760
    %v125 = vsub.f32 %v29, %v124
    %v126 = vand.u32 %v125, 4294901760
    %v127 = vsub.f32 %v125, %v126
    %v128 = vand.u32 %v127, 4294901760
    %129 = vmatpush.msra.mxu0 %v128
    %v130 = vand.u32 %v28, 4294901760
    %v131 = vsub.f32 %v28, %v130
    %v132 = vand.u32 %v131, 4294901760
    %v133 = vsub.f32 %v131, %v132
    %v134 = vand.u32 %v133, 4294901760
    %135 = vmatpush.msra.mxu0 %v134
    %v136 = vand.u32 %v27, 4294901760
    %v137 = vsub.f32 %v27, %v136
    %v138 = vand.u32 %v137, 4294901760
    %v139 = vsub.f32 %v137, %v138
    %v140 = vand.u32 %v139, 4294901760
    %141 = vmatpush.msra.mxu0 %v140
    %v142 = vand.u32 %v26, 4294901760
    %v143 = vsub.f32 %v26, %v142
    %v144 = vand.u32 %v143, 4294901760
    %v145 = vsub.f32 %v143, %v144
    %v146 = vand.u32 %v145, 4294901760
    %147 = vmatpush.msra.mxu0 %v146
    %v148 = vand.u32 %v25, 4294901760
    %v149 = vsub.f32 %v25, %v148
    %v150 = vand.u32 %v149, 4294901760
    %v151 = vsub.f32 %v149, %v150
    %v152 = vand.u32 %v151, 4294901760
    %153 = vmatpush.msra.mxu0 %v152
    %v154 = vand.u32 %v24, 4294901760
    %v155 = vsub.f32 %v24, %v154
    %v156 = vand.u32 %v155, 4294901760
    %v157 = vsub.f32 %v155, %v156
    %v158 = vand.u32 %v157, 4294901760
    %159 = vmatpush.msra.mxu0 %v158
    %v160 = vand.u32 %v39, 4294901760
    %161 = vmatmul.f32.gmra.mxu0 %v160
    %v162 = vpop.f32.mrf.mxu0
    %v163 = vadd.f32 %v77, %v162
    %164 = vdwg.mxu0
    %165 = vmatpush.msra.mxu0 0.0
    %166 = vmatpush.msra.mxu0 0.0
    %167 = vmatpush.msra.mxu0 0.0
    %v168 = vand.u32 %v36, 4294901760
    %v169 = vsub.f32 %v36, %v168
    %170 = vmatpush.msra.mxu0 %v169
    %v171 = vand.u32 %v35, 4294901760
    %v172 = vsub.f32 %v35, %v171
    %173 = vmatpush.msra.mxu0 %v172
    %v174 = vand.u32 %v34, 4294901760
    %v175 = vsub.f32 %v34, %v174
    %176 = vmatpush.msra.mxu0 %v175
    %v177 = vand.u32 %v33, 4294901760
    %v178 = vsub.f32 %v33, %v177
    %179 = vmatpush.msra.mxu0 %v178
    %v180 = vand.u32 %v32, 4294901760
    %v181 = vsub.f32 %v32, %v180
    %182 = vmatpush.msra.mxu0 %v181
    %v183 = vand.u32 %v31, 4294901760
    %v184 = vsub.f32 %v31, %v183
    %185 = vmatpush.msra.mxu0 %v184
    %v186 = vand.u32 %v30, 4294901760
    %v187 = vsub.f32 %v30, %v186
    %188 = vmatpush.msra.mxu0 %v187
    %v189 = vand.u32 %v29, 4294901760
    %v190 = vsub.f32 %v29, %v189
    %191 = vmatpush.msra.mxu0 %v190
    %v192 = vand.u32 %v28, 4294901760
    %v193 = vsub.f32 %v28, %v192
    %194 = vmatpush.msra.mxu0 %v193
    %v195 = vand.u32 %v27, 4294901760
    %v196 = vsub.f32 %v27, %v195
    %197 = vmatpush.msra.mxu0 %v196
    %v198 = vand.u32 %v26, 4294901760
    %v199 = vsub.f32 %v26, %v198
    %200 = vmatpush.msra.mxu0 %v199
    %v201 = vand.u32 %v25, 4294901760
    %v202 = vsub.f32 %v25, %v201
    %203 = vmatpush.msra.mxu0 %v202
    %v204 = vand.u32 %v24, 4294901760
    %v205 = vsub.f32 %v24, %v204
    %206 = vmatpush.msra.mxu0 %v205
    %v207 = vand.u32 %v39, 4294901760
    %v208 = vsub.f32 %v39, %v207
    %209 = vmatmul.f32.gmra.mxu0 %v208
    %v210 = vpop.f32.mrf.mxu0
    %v211 = vadd.f32 %v163, %v210
    %212 = vdwg.mxu0
    %213 = vmatpush.msra.mxu0 0.0
    %214 = vmatpush.msra.mxu0 0.0
    %215 = vmatpush.msra.mxu0 0.0
    %v216 = vand.u32 %v36, 4294901760
    %217 = vmatpush.msra.mxu0 %v216
    %v218 = vand.u32 %v35, 4294901760
    %219 = vmatpush.msra.mxu0 %v218
    %v220 = vand.u32 %v34, 4294901760
    %221 = vmatpush.msra.mxu0 %v220
    %v222 = vand.u32 %v33, 4294901760
    %223 = vmatpush.msra.mxu0 %v222
    %v224 = vand.u32 %v32, 4294901760
    %225 = vmatpush.msra.mxu0 %v224
    %v226 = vand.u32 %v31, 4294901760
    %227 = vmatpush.msra.mxu0 %v226
    %v228 = vand.u32 %v30, 4294901760
    %229 = vmatpush.msra.mxu0 %v228
    %v230 = vand.u32 %v29, 4294901760
    %231 = vmatpush.msra.mxu0 %v230
    %v232 = vand.u32 %v28, 4294901760
    %233 = vmatpush.msra.mxu0 %v232
    %v234 = vand.u32 %v27, 4294901760
    %235 = vmatpush.msra.mxu0 %v234
    %v236 = vand.u32 %v26, 4294901760
    %237 = vmatpush.msra.mxu0 %v236
    %v238 = vand.u32 %v25, 4294901760
    %239 = vmatpush.msra.mxu0 %v238
    %v240 = vand.u32 %v24, 4294901760
    %241 = vmatpush.msra.mxu0 %v240
    %v242 = vand.u32 %v39, 4294901760
    %v243 = vsub.f32 %v39, %v242
    %v244 = vand.u32 %v243, 4294901760
    %245 = vmatmul.f32.gmra.mxu0 %v244
    %v246 = vpop.f32.mrf.mxu0
    %v247 = vadd.f32 %v211, %v246
    %248 = vdwg.mxu0
    %249 = vmatpush.msra.mxu0 0.0
    %250 = vmatpush.msra.mxu0 0.0
    %251 = vmatpush.msra.mxu0 0.0
    %v252 = vand.u32 %v36, 4294901760
    %v253 = vsub.f32 %v36, %v252
    %v254 = vand.u32 %v253, 4294901760
    %255 = vmatpush.msra.mxu0 %v254
    %v256 = vand.u32 %v35, 4294901760
    %v257 = vsub.f32 %v35, %v256
    %v258 = vand.u32 %v257, 4294901760
    %259 = vmatpush.msra.mxu0 %v258
    %v260 = vand.u32 %v34, 4294901760
    %v261 = vsub.f32 %v34, %v260
    %v262 = vand.u32 %v261, 4294901760
    %263 = vmatpush.msra.mxu0 %v262
    %v264 = vand.u32 %v33, 4294901760
    %v265 = vsub.f32 %v33, %v264
    %v266 = vand.u32 %v265, 4294901760
    %267 = vmatpush.msra.mxu0 %v266
    %v268 = vand.u32 %v32, 4294901760
    %v269 = vsub.f32 %v32, %v268
    %v270 = vand.u32 %v269, 4294901760
    %271 = vmatpush.msra.mxu0 %v270
    %v272 = vand.u32 %v31, 4294901760
    %v273 = vsub.f32 %v31, %v272
    %v274 = vand.u32 %v273, 4294901760
    %275 = vmatpush.msra.mxu0 %v274
    %v276 = vand.u32 %v30, 4294901760
    %v277 = vsub.f32 %v30, %v276
    %v278 = vand.u32 %v277, 4294901760
    %279 = vmatpush.msra.mxu0 %v278
    %v280 = vand.u32 %v29, 4294901760
    %v281 = vsub.f32 %v29, %v280
    %v282 = vand.u32 %v281, 4294901760
    %283 = vmatpush.msra.mxu0 %v282
    %v284 = vand.u32 %v28, 4294901760
    %v285 = vsub.f32 %v28, %v284
    %v286 = vand.u32 %v285, 4294901760
    %287 = vmatpush.msra.mxu0 %v286
    %v288 = vand.u32 %v27, 4294901760
    %v289 = vsub.f32 %v27, %v288
    %v290 = vand.u32 %v289, 4294901760
    %291 = vmatpush.msra.mxu0 %v290
    %v292 = vand.u32 %v26, 4294901760
    %v293 = vsub.f32 %v26, %v292
    %v294 = vand.u32 %v293, 4294901760
    %295 = vmatpush.msra.mxu0 %v294
    %v296 = vand.u32 %v25, 4294901760
    %v297 = vsub.f32 %v25, %v296
    %v298 = vand.u32 %v297, 4294901760
    %299 = vmatpush.msra.mxu0 %v298
    %v300 = vand.u32 %v24, 4294901760
    %v301 = vsub.f32 %v24, %v300
    %v302 = vand.u32 %v301, 4294901760
    %303 = vmatpush.msra.mxu0 %v302
    %v304 = vand.u32 %v39, 4294901760
    %305 = vmatmul.f32.gmra.mxu0 %v304
    %v306 = vpop.f32.mrf.mxu0
    %v307 = vadd.f32 %v247, %v306
    %308 = vdwg.mxu0
    %309 = vmatpush.msra.mxu0 0.0
    %310 = vmatpush.msra.mxu0 0.0
    %311 = vmatpush.msra.mxu0 0.0
    %v312 = vand.u32 %v36, 4294901760
    %313 = vmatpush.msra.mxu0 %v312
    %v314 = vand.u32 %v35, 4294901760
    %315 = vmatpush.msra.mxu0 %v314
    %v316 = vand.u32 %v34, 4294901760
    %317 = vmatpush.msra.mxu0 %v316
    %v318 = vand.u32 %v33, 4294901760
    %319 = vmatpush.msra.mxu0 %v318
    %v320 = vand.u32 %v32, 4294901760
    %321 = vmatpush.msra.mxu0 %v320
    %v322 = vand.u32 %v31, 4294901760
    %323 = vmatpush.msra.mxu0 %v322
    %v324 = vand.u32 %v30, 4294901760
    %325 = vmatpush.msra.mxu0 %v324
    %v326 = vand.u32 %v29, 4294901760
    %327 = vmatpush.msra.mxu0 %v326
    %v328 = vand.u32 %v28, 4294901760
    %329 = vmatpush.msra.mxu0 %v328
    %v330 = vand.u32 %v27, 4294901760
    %331 = vmatpush.msra.mxu0 %v330
    %v332 = vand.u32 %v26, 4294901760
    %333 = vmatpush.msra.mxu0 %v332
    %v334 = vand.u32 %v25, 4294901760
    %335 = vmatpush.msra.mxu0 %v334
    %v336 = vand.u32 %v24, 4294901760
    %337 = vmatpush.msra.mxu0 %v336
    %v338 = vand.u32 %v39, 4294901760
    %339 = vmatmul.f32.gmra.mxu0 %v338
    %v340 = vpop.f32.mrf.mxu0
    %v341 = vadd.f32 %v307, %v340
    %342 = vdwg.mxu0
    %v343 = vld [vmem:[%s1] sm:$0xff]
    %345 = vset.pattern.permute.xlu0 0
    %346 = vperm.xlu0 %345, %v343
    %v347 = vpop.permute.xlu0 %346
    %v349 = vmul.f32 %v341, %v347
    %vm350 = vcmask 130048
    %351 = vst.msk [vmem:[#allocation2] sm:$0xff] %vm350, %v349
    // Predicated region
    $region14: #{tpu_custom_call.1} parent=1 // pred_check
      _
    $region15: #{tpu_custom_call.1} parent=1 // pred_check_branch
      %353 = sbr.rel (0) target = $region17
    $region16: #{tpu_custom_call.1} parent=1 // pred_region
      %355 = vsyncadd [#allocation3], 0
      %s357 = sshll.u32 [#allocation2], 4
      %s358 = int_to_ptr.vmem [resolvable:$true] %s357
      %s359 = sshll.u32 %s3, 4
      %s360 = int_to_ptr.hbm [resolvable:$true] %s359
      %362 = dma.vmem_to_hbm [thread:$0]  %s358, 128, %s360, [#allocation3]
    $region17: #{tpu_custom_call.1} parent=1 // pred_fallthru
      _
    // Predicated region
    $region18: #{tpu_custom_call.1} parent=1 // pred_check
      _
    $region19: #{tpu_custom_call.1} parent=1 // pred_check_branch
      %364 = sbr.rel (0) target = $region21
    $region20: #{tpu_custom_call.1} parent=1 // pred_region
      %366 = dma.done [#allocation3], 128
    $region21: #{tpu_custom_call.1} parent=1 // pred_fallthru
      _
    %367 = vsyncpa [#allocation3], 1

</llo_original>
